<compile_context>
chip_gen: v5e
topology: v5e:2x2
jax: 0.10.0
libtpu: 0.0.40
codegen_flags: <defaults>
</compile_context>

<pallas_src>
import functools

import jax
import jax.numpy as jnp
from jax.experimental import pallas as pl
from jax.experimental.pallas import tpu as pltpu


def _round_up(x, m):
    return (x + m - 1) // m * m


def _vmem_bytes(tile_b, f_in_p, f_out_p):
    # Rough resident-VMEM estimate: double-buffered x/out tiles, double-
    # buffered (but tiny) weights + biases, plus f32 intermediates.
    bf16, f32 = 2, 4
    x_t = tile_b * f_in_p * bf16
    o_t = tile_b * f_out_p * f32
    w = (f_in_p * 2 * f_out_p + f_out_p * f_out_p) * bf16
    b = 3 * f_out_p * f32
    tmp = 3 * tile_b * f_out_p * f32          # hs, out, identity
    return 2 * (x_t + o_t) + 2 * (w + b) + tmp


def _resblock_kernel(x_ref, w1s_ref, b1s_ref, w2_ref, b2_ref, o_ref, *,
                     f_out_p):
    x = x_ref[...]                                        # [TB, F_in_p] bf16

    # Fused (linear1 | skip) matmul: both branches share LHS x, so one wide
    # MXU push; f32 accumulation, f32 bias/ReLU epilogue.
    hs = jnp.dot(x, w1s_ref[...], preferred_element_type=jnp.float32)
    hs = hs + b1s_ref[...]                                # [TB, 2*F_out_p] f32

    h = jnp.maximum(hs[:, :f_out_p], 0.0)                 # linear1 + ReLU
    identity = hs[:, f_out_p:]                            # skip branch

    # dropout: inference-mode identity (see header comment).

    out = jnp.dot(h.astype(w2_ref.dtype), w2_ref[...],    # linear2 (bf16 MXU)
                  preferred_element_type=jnp.float32)
    out = out + b2_ref[...]

    # residual add + ReLU in f32, single downcast at the store.
    o_ref[...] = jnp.maximum(out + identity, 0.0).astype(o_ref.dtype)


def residual_block(x, w1, b1, w2, b2, ws, bs, *, tile_b=None):
    """Fused ResidualBlock forward.

    x  : [B, F_in] float32
    w1 : [F_in,  F_out]  (pre-transposed vs PyTorch's [out, in])
    w2 : [F_out, F_out]
    ws : [F_in,  F_out]  (skip_connection; module has F_in != F_out)
    b1, b2, bs : [F_out]
    """
    B, F_in = x.shape
    F_out = w1.shape[1]
    out_dtype = x.dtype

    # Lane-dense padding of feature axes.
    F_in_p = _round_up(F_in, 128)
    F_out_p = _round_up(F_out, 128)

    # Batch tile: grid > 1 for large B (pipelining + megacore), VMEM-safe.
    if tile_b is None:
        tile_b = 512 if B >= 512 else (256 if B >= 256 else _round_up(B, 8))
    tile_b = max(8, _round_up(tile_b, 8))
    while tile_b > 8 and _vmem_bytes(tile_b, F_in_p, F_out_p) > 40 * 2**20:
        tile_b //= 2
    B_pad = _round_up(B, tile_b)

    # Host-side prep: pad, fuse [w1 | ws], cast compute operands to bf16,
    # keep biases in f32 (added post-accumulation).
    def pad2(a, r, c):
        return jnp.pad(a, ((0, r - a.shape[0]), (0, c - a.shape[1])))

    x_p = pad2(x, B_pad, F_in_p).astype(jnp.bfloat16)
    w1s = jnp.concatenate(
        [pad2(w1, F_in_p, F_out_p), pad2(ws, F_in_p, F_out_p)],
        axis=1).astype(jnp.bfloat16)                      # [F_in_p, 2*F_out_p]
    b1s = jnp.concatenate(
        [jnp.pad(b1, (0, F_out_p - F_out)),
         jnp.pad(bs, (0, F_out_p - F_out))]).reshape(
             1, 2 * F_out_p).astype(jnp.float32)
    w2_p = pad2(w2, F_out_p, F_out_p).astype(jnp.bfloat16)
    b2_p = jnp.pad(b2, (0, F_out_p - F_out)).reshape(
        1, F_out_p).astype(jnp.float32)

    grid = (B_pad // tile_b,)

    out_itemsize = jnp.dtype(out_dtype).itemsize
    cost = pl.CostEstimate(
        flops=2 * B_pad * F_in_p * (2 * F_out_p)
              + 2 * B_pad * F_out_p * F_out_p,
        transcendentals=0,
        bytes_accessed=(x_p.size * 2 + w1s.size * 2 + w2_p.size * 2
                        + b1s.size * 4 + b2_p.size * 4
                        + B_pad * F_out_p * out_itemsize))

    vmem_limit = int(min(max(2 * _vmem_bytes(tile_b, F_in_p, F_out_p),
                             32 * 2**20), 48 * 2**20))

    out_p = pl.pallas_call(
        functools.partial(_resblock_kernel, f_out_p=F_out_p),
        out_shape=jax.ShapeDtypeStruct((B_pad, F_out_p), out_dtype),
        grid_spec=pltpu.PrefetchScalarGridSpec(
            num_scalar_prefetch=0,
            grid=grid,
            in_specs=[
                pl.BlockSpec((tile_b, F_in_p), lambda i: (i, 0)),       # x
                pl.BlockSpec((F_in_p, 2 * F_out_p), lambda i: (0, 0)),  # [w1|ws]
                pl.BlockSpec((1, 2 * F_out_p), lambda i: (0, 0)),       # [b1|bs]
                pl.BlockSpec((F_out_p, F_out_p), lambda i: (0, 0)),     # w2
                pl.BlockSpec((1, F_out_p), lambda i: (0, 0)),           # b2
            ],
            out_specs=pl.BlockSpec((tile_b, F_out_p), lambda i: (i, 0)),
        ),
        compiler_params=pltpu.CompilerParams(
            dimension_semantics=("parallel",),
            vmem_limit_bytes=vmem_limit),
        cost_estimate=cost,
    )(x_p, w1s, b1s, w2_p, b2_p)

    return out_p[:B, :F_out]


def _reference(x, w1, b1, w2, b2, ws, bs):
    # Mirrors the kernel's bf16-input / f32-accumulate numerics.
    bf = jnp.bfloat16
    xb = x.astype(bf)
    identity = jnp.dot(xb, ws.astype(bf),
                       preferred_element_type=jnp.float32) + bs
    h = jnp.maximum(
        jnp.dot(xb, w1.astype(bf), preferred_element_type=jnp.float32) + b1,
        0.0)
    out = jnp.dot(h.astype(bf), w2.astype(bf),
                  preferred_element_type=jnp.float32) + b2
    return jnp.maximum(out + identity, 0.0)


if __name__ == "__main__":
    # Small shapes consistent with the module: a feature-vector MLP block.
    B, F_IN, F_OUT = 8, 16, 32

    key = jax.random.PRNGKey(0)
    kx, k1, kb1, k2, kb2, ks, kbs = jax.random.split(key, 7)

    x = jax.random.normal(kx, (B, F_IN), dtype=jnp.float32)

    # Deterministic "PyTorch-like" uniform init (kaiming-uniform bounds).
    def lin_init(kw, kb, fan_in, fan_out):
        bound = 1.0 / jnp.sqrt(jnp.float32(fan_in))
        w = jax.random.uniform(kw, (fan_in, fan_out), jnp.float32,
                               -bound, bound)
        b = jax.random.uniform(kb, (fan_out,), jnp.float32, -bound, bound)
        return w, b

    w1, b1 = lin_init(k1, kb1, F_IN, F_OUT)    # linear1
    w2, b2 = lin_init(k2, kb2, F_OUT, F_OUT)   # linear2
    ws, bs = lin_init(ks, kbs, F_IN, F_OUT)    # skip_connection (F_IN != F_OUT)

    out = residual_block(x, w1, b1, w2, b2, ws, bs)
    out = jax.block_until_ready(out)

    ref = _reference(x, w1, b1, w2, b2, ws, bs)
    assert out.shape == (B, F_OUT)
    assert jnp.allclose(out, ref, atol=1e-2, rtol=1e-2), "mismatch vs reference"

    print("KERNEL_OK")
</pallas_src>

<mosaic_0001>
module attributes {stable_mosaic.version = 11 : i64} {
  func.func @_resblock_kernel(%arg0: i32, %arg1: memref<8x128xbf16, #tpu.memory_space<vmem>>, %arg2: memref<128x256xbf16, #tpu.memory_space<vmem>>, %arg3: memref<1x256xf32, #tpu.memory_space<vmem>>, %arg4: memref<128x128xbf16, #tpu.memory_space<vmem>>, %arg5: memref<1x128xf32, #tpu.memory_space<vmem>>, %arg6: memref<8x128xf32, #tpu.memory_space<vmem>>) attributes {dimension_semantics = [#tpu.dimension_semantics<parallel>], iteration_bounds = array<i64: 1>, scalar_prefetch = 0 : i64, scratch_operands = 0 : i64, tpu.core_type = #tpu.core_type<tc>, window_params = [{transform_indices = @transform_0, window_bounds = array<i64: 8, 128>}, {pipeline_mode = #tpu.pipeline_mode<synchronous>, transform_indices = @transform_1, window_bounds = array<i64: 128, 256>}, {pipeline_mode = #tpu.pipeline_mode<synchronous>, transform_indices = @transform_2, window_bounds = array<i64: 1, 256>}, {pipeline_mode = #tpu.pipeline_mode<synchronous>, transform_indices = @transform_3, window_bounds = array<i64: 128, 128>}, {pipeline_mode = #tpu.pipeline_mode<synchronous>, transform_indices = @transform_4, window_bounds = array<i64: 1, 128>}, {transform_indices = @transform_5, window_bounds = array<i64: 8, 128>}]} {
    %c0 = arith.constant 0 : index
    %c0_0 = arith.constant 0 : index
    %0 = vector.load %arg1[%c0, %c0_0] : memref<8x128xbf16, #tpu.memory_space<vmem>>, vector<8x128xbf16>
    %c0_1 = arith.constant 0 : index
    %c0_2 = arith.constant 0 : index
    %1 = vector.load %arg2[%c0_1, %c0_2] : memref<128x256xbf16, #tpu.memory_space<vmem>>, vector<128x256xbf16>
    %cst = arith.constant dense<0.000000e+00> : vector<8x256xf32>
    %2 = tpu.matmul %0, %1, %cst {dimension_numbers = #tpu.dot_dimension_numbers<[1], [0], [0], [1], [0, 0, 1, 1], [], []>} : vector<8x128xbf16>, vector<128x256xbf16>, vector<8x256xf32> -> vector<8x256xf32>
    %c0_3 = arith.constant 0 : index
    %c0_4 = arith.constant 0 : index
    %3 = vector.load %arg3[%c0_3, %c0_4] : memref<1x256xf32, #tpu.memory_space<vmem>>, vector<1x256xf32>
    %4 = vector.broadcast %3 : vector<1x256xf32> to vector<8x256xf32>
    %5 = arith.addf %2, %4 : vector<8x256xf32>
    %6 = vector.extract_strided_slice %5 {offsets = [0, 0], sizes = [8, 128], strides = [1, 1]} : vector<8x256xf32> to vector<8x128xf32>
    %cst_5 = arith.constant 0.000000e+00 : f32
    %7 = vector.broadcast %cst_5 : f32 to vector<8x128xf32>
    %8 = arith.maximumf %6, %7 : vector<8x128xf32>
    %9 = vector.extract_strided_slice %5 {offsets = [0, 128], sizes = [8, 128], strides = [1, 1]} : vector<8x256xf32> to vector<8x128xf32>
    %10 = arith.truncf %8 : vector<8x128xf32> to vector<8x128xbf16>
    %c0_6 = arith.constant 0 : index
    %c0_7 = arith.constant 0 : index
    %11 = vector.load %arg4[%c0_6, %c0_7] : memref<128x128xbf16, #tpu.memory_space<vmem>>, vector<128x128xbf16>
    %cst_8 = arith.constant dense<0.000000e+00> : vector<8x128xf32>
    %12 = tpu.matmul %10, %11, %cst_8 {dimension_numbers = #tpu.dot_dimension_numbers<[1], [0], [0], [1], [0, 0, 1, 1], [], []>} : vector<8x128xbf16>, vector<128x128xbf16>, vector<8x128xf32> -> vector<8x128xf32>
    %c0_9 = arith.constant 0 : index
    %c0_10 = arith.constant 0 : index
    %13 = vector.load %arg5[%c0_9, %c0_10] : memref<1x128xf32, #tpu.memory_space<vmem>>, vector<1x128xf32>
    %14 = vector.broadcast %13 : vector<1x128xf32> to vector<8x128xf32>
    %15 = arith.addf %12, %14 : vector<8x128xf32>
    %16 = arith.addf %15, %9 : vector<8x128xf32>
    %cst_11 = arith.constant 0.000000e+00 : f32
    %17 = vector.broadcast %cst_11 : f32 to vector<8x128xf32>
    %18 = arith.maximumf %16, %17 : vector<8x128xf32>
    %c0_12 = arith.constant 0 : index
    %c0_13 = arith.constant 0 : index
    %19 = vector.load %arg6[%c0_12, %c0_13] : memref<8x128xf32, #tpu.memory_space<vmem>>, vector<8x128xf32>
    tpu.vector_store %arg6[%c0_12, %c0_13], %18 {strides = array<i32>} : memref<8x128xf32, #tpu.memory_space<vmem>>, vector<8x128xf32>,
    return
  }
  func.func @transform_0(%arg0: i32) -> (i32, i32) {
    %c0_i32 = arith.constant 0 : i32
    %c0_i32_0 = arith.constant 0 : i32
    return %arg0, %c0_i32 : i32, i32
  }
  func.func @transform_1(%arg0: i32) -> (i32, i32) {
    %c0_i32 = arith.constant 0 : i32
    %c0_i32_0 = arith.constant 0 : i32
    %c0_i32_1 = arith.constant 0 : i32
    return %c0_i32, %c0_i32_0 : i32, i32
  }
  func.func @transform_2(%arg0: i32) -> (i32, i32) {
    %c0_i32 = arith.constant 0 : i32
    %c0_i32_0 = arith.constant 0 : i32
    %c0_i32_1 = arith.constant 0 : i32
    return %c0_i32, %c0_i32_0 : i32, i32
  }
  func.func @transform_3(%arg0: i32) -> (i32, i32) {
    %c0_i32 = arith.constant 0 : i32
    %c0_i32_0 = arith.constant 0 : i32
    %c0_i32_1 = arith.constant 0 : i32
    return %c0_i32, %c0_i32_0 : i32, i32
  }
  func.func @transform_4(%arg0: i32) -> (i32, i32) {
    %c0_i32 = arith.constant 0 : i32
    %c0_i32_0 = arith.constant 0 : i32
    %c0_i32_1 = arith.constant 0 : i32
    return %c0_i32, %c0_i32_0 : i32, i32
  }
  func.func @transform_5(%arg0: i32) -> (i32, i32) {
    %c0_i32 = arith.constant 0 : i32
    %c0_i32_0 = arith.constant 0 : i32
    return %arg0, %c0_i32 : i32, i32
  }
}

</mosaic_0001>

<llo_original>
// kernel: tpu_custom_call.1
$region0: #{tpu_custom_call.1}
  #allocation0 [shape = 'u32[]', space=smem, size = 0x4, offset = 0x4, fixed_abs, tag = 'smem constant byte address 0x4 - core index']
  #allocation1 [shape = 'u32[72,128]{1,0:T(1,128)}', space=vmem, size = 0x9000, scoped, tag = 'internal scratch']
  %s0 = inlined_call_operand.hbm [shape: bf16[8,128], index: 0, kind: input, shape index: {}]
  %s1 = inlined_call_operand.hbm [shape: bf16[128,256], index: 1, kind: input, shape index: {}]
  %s2 = inlined_call_operand.hbm [shape: f32[1,256], index: 2, kind: input, shape index: {}]
  %s3 = inlined_call_operand.hbm [shape: bf16[128,128], index: 3, kind: input, shape index: {}]
  %s4 = inlined_call_operand.vmem [shape: f32[1,128], index: 4, kind: input, shape index: {}]
  %s5 = inlined_call_operand.hbm [shape: f32[8,128], index: 5, kind: output, shape index: {}]
  %s6 = sld [smem:[#allocation0]]
  $region46: #{tpu_custom_call.1} parent=0
    _
  %s8 = ssub.s32 1, %s6
  %s9 = scalar_select 0, %s8, %s6
  $region1: #{tpu_custom_call.1} parent=0
    #allocation2 [shape = 'u8[2048]{0}', space=vmem, size = 0x800, scoped, tag = 'input window, operand 0, single buffered']
    #allocation3 [shape = 's32[1]{0}', space=sflag, size = 0x4, scoped, tag = 'scoped memory for tpu_custom_call.1']
    #allocation4 [shape = 's32[1]{0}', space=sflag, size = 0x4, scoped, tag = 'scoped memory for tpu_custom_call.1']
    #allocation5 [shape = 'u8[65536]{0}', space=vmem, size = 0x10000, scoped, tag = 'input window, operand 1, single buffered']
    #allocation6 [shape = 's32[1]{0}', space=sflag, size = 0x4, scoped, tag = 'scoped memory for tpu_custom_call.1']
    #allocation7 [shape = 'u8[1024]{0}', space=vmem, size = 0x400, scoped, tag = 'input window, operand 2, single buffered']
    #allocation8 [shape = 'u8[32768]{0}', space=vmem, size = 0x8000, scoped, tag = 'input window, operand 3, single buffered']
    #allocation9 [shape = 's32[1]{0}', space=sflag, size = 0x4, scoped, tag = 'scoped memory for tpu_custom_call.1']
    #allocation10 [shape = 'u8[4096]{0}', space=vmem, size = 0x1000, scoped, tag = 'output window, operand 0, single buffered']
    %10 = vsyncpa [#allocation3], 0
    %11 = vsyncpa [#allocation6], 0
    %12 = vsyncpa [#allocation9], 0
    %13 = vsyncpa [#allocation4], 0
    // Predicated region
    $region2: #{tpu_custom_call.1} parent=1 // pred_check
      _
    $region3: #{tpu_custom_call.1} parent=1 // pred_check_branch
      %15 = sbr.rel (0) target = $region5
    $region4: #{tpu_custom_call.1} parent=1 // pred_region
      %17 = vsyncadd [#allocation3], 0
      %s19 = sshll.u32 %s0, 4
      %s20 = int_to_ptr.hbm [resolvable:$true] %s19
      %s21 = sshll.u32 [#allocation2], 4
      %s22 = int_to_ptr.vmem [resolvable:$true] %s21
      %24 = dma.hbm_to_vmem [thread:$0]  %s20, 64, %s22, [#allocation3]
    $region5: #{tpu_custom_call.1} parent=1 // pred_fallthru
      _
    // Predicated region
    $region6: #{tpu_custom_call.1} parent=1 // pred_check
      _
    $region7: #{tpu_custom_call.1} parent=1 // pred_check_branch
      %26 = sbr.rel (0) target = $region9
    $region8: #{tpu_custom_call.1} parent=1 // pred_region
      %28 = vsyncadd [#allocation6], 0
      %s29 = sshll.u32 %s1, 4
      %s30 = int_to_ptr.hbm [resolvable:$true] %s29
      %s31 = sshll.u32 [#allocation5], 4
      %s32 = int_to_ptr.vmem [resolvable:$true] %s31
      %37 = dma.hbm_to_vmem [thread:$0]  %s30, 2048, %s32, [#allocation6], 128, 128, 8
    $region9: #{tpu_custom_call.1} parent=1 // pred_fallthru
      _
    // Predicated region
    $region10: #{tpu_custom_call.1} parent=1 // pred_check
      _
    $region11: #{tpu_custom_call.1} parent=1 // pred_check_branch
      %39 = sbr.rel (0) target = $region13
    $region12: #{tpu_custom_call.1} parent=1 // pred_region
      %41 = vsyncadd [#allocation6], 0
      %s43 = sshll.u32 %s2, 4
      %s44 = int_to_ptr.hbm [resolvable:$true] %s43
      %s45 = sshll.u32 [#allocation7], 4
      %s46 = int_to_ptr.vmem [resolvable:$true] %s45
      %48 = dma.hbm_to_vmem [thread:$0]  %s44, 32, %s46, [#allocation6]
    $region13: #{tpu_custom_call.1} parent=1 // pred_fallthru
      _
    // Predicated region
    $region14: #{tpu_custom_call.1} parent=1 // pred_check
      _
    $region15: #{tpu_custom_call.1} parent=1 // pred_check_branch
      %50 = sbr.rel (0) target = $region17
    $region16: #{tpu_custom_call.1} parent=1 // pred_region
      %52 = vsyncadd [#allocation9], 0
      %s53 = sshll.u32 %s3, 4
      %s54 = int_to_ptr.hbm [resolvable:$true] %s53
      %s55 = sshll.u32 [#allocation8], 4
      %s56 = int_to_ptr.vmem [resolvable:$true] %s55
      %61 = dma.hbm_to_vmem [thread:$0]  %s54, 1024, %s56, [#allocation9], 64, 64, 4
    $region17: #{tpu_custom_call.1} parent=1 // pred_fallthru
      _
    // Predicated region
    $region18: #{tpu_custom_call.1} parent=1 // pred_check
      _
    $region19: #{tpu_custom_call.1} parent=1 // pred_check_branch
      %63 = sbr.rel (0) target = $region21
    $region20: #{tpu_custom_call.1} parent=1 // pred_region
      _
    $region21: #{tpu_custom_call.1} parent=1 // pred_fallthru
      _
    // Predicated region
    $region22: #{tpu_custom_call.1} parent=1 // pred_check
      _
    $region23: #{tpu_custom_call.1} parent=1 // pred_check_branch
      %65 = sbr.rel (0) target = $region25
    $region24: #{tpu_custom_call.1} parent=1 // pred_region
      %67 = dma.done [#allocation3], 64
    $region25: #{tpu_custom_call.1} parent=1 // pred_fallthru
      _
    // Predicated region
    $region26: #{tpu_custom_call.1} parent=1 // pred_check
      _
    $region27: #{tpu_custom_call.1} parent=1 // pred_check_branch
      %69 = sbr.rel (0) target = $region29
    $region28: #{tpu_custom_call.1} parent=1 // pred_region
      %71 = dma.done [#allocation6], 2048
    $region29: #{tpu_custom_call.1} parent=1 // pred_fallthru
      _
    // Predicated region
    $region30: #{tpu_custom_call.1} parent=1 // pred_check
      _
    $region31: #{tpu_custom_call.1} parent=1 // pred_check_branch
      %73 = sbr.rel (0) target = $region33
    $region32: #{tpu_custom_call.1} parent=1 // pred_region
      %75 = dma.done [#allocation6], 32
    $region33: #{tpu_custom_call.1} parent=1 // pred_fallthru
      _
    // Predicated region
    $region34: #{tpu_custom_call.1} parent=1 // pred_check
      _
    $region35: #{tpu_custom_call.1} parent=1 // pred_check_branch
      %77 = sbr.rel (0) target = $region37
    $region36: #{tpu_custom_call.1} parent=1 // pred_region
      %79 = dma.done [#allocation9], 1024
    $region37: #{tpu_custom_call.1} parent=1 // pred_fallthru
      _
    %v80 = vld [vmem:[#allocation2] sm:$0xf]
    %v81 = vld [vmem:[#allocation5] sm:$0xff]
    %v82 = vld [vmem:[#allocation5 + $0x8] sm:$0xff]
    %v83 = vld [vmem:[#allocation5 + $0x10] sm:$0xff]
    %v84 = vld [vmem:[#allocation5 + $0x18] sm:$0xff]
    %v85 = vld [vmem:[#allocation5 + $0x20] sm:$0xff]
    %v86 = vld [vmem:[#allocation5 + $0x28] sm:$0xff]
    %v87 = vld [vmem:[#allocation5 + $0x30] sm:$0xff]
    %v88 = vld [vmem:[#allocation5 + $0x38] sm:$0xff]
    %v89 = vld [vmem:[#allocation5 + $0x40] sm:$0xff]
    %v90 = vld [vmem:[#allocation5 + $0x48] sm:$0xff]
    %v91 = vld [vmem:[#allocation5 + $0x50] sm:$0xff]
    %v92 = vld [vmem:[#allocation5 + $0x58] sm:$0xff]
    %v93 = vld [vmem:[#allocation5 + $0x60] sm:$0xff]
    %v94 = vld [vmem:[#allocation5 + $0x68] sm:$0xff]
    %v95 = vld [vmem:[#allocation5 + $0x70] sm:$0xff]
    %v96 = vld [vmem:[#allocation5 + $0x78] sm:$0xff]
    %v97 = vld [vmem:[#allocation7] sm:$0x3]
    %v99 = vperm.slane %v97, 0
    %v100 = vperm.slane %v97, 1
    %v119 = vunpack.c.l.b16 %v81
    %v120 = vunpack.c.h.b16 %v81
    %v121 = vunpack.c.l.b16 %v82
    %v122 = vunpack.c.h.b16 %v82
    %v123 = vunpack.c.l.b16 %v83
    %v124 = vunpack.c.h.b16 %v83
    %v125 = vunpack.c.l.b16 %v84
    %v126 = vunpack.c.h.b16 %v84
    %v127 = vunpack.c.l.b16 %v85
    %v128 = vunpack.c.h.b16 %v85
    %v129 = vunpack.c.l.b16 %v86
    %v130 = vunpack.c.h.b16 %v86
    %v131 = vunpack.c.l.b16 %v87
    %v132 = vunpack.c.h.b16 %v87
    %v133 = vunpack.c.l.b16 %v88
    %v134 = vunpack.c.h.b16 %v88
    %v135 = vunpack.c.l.b16 %v89
    %v136 = vunpack.c.h.b16 %v89
    %v137 = vunpack.c.l.b16 %v90
    %v138 = vunpack.c.h.b16 %v90
    %v139 = vunpack.c.l.b16 %v91
    %v140 = vunpack.c.h.b16 %v91
    %v141 = vunpack.c.l.b16 %v92
    %v142 = vunpack.c.h.b16 %v92
    %v143 = vunpack.c.l.b16 %v93
    %v144 = vunpack.c.h.b16 %v93
    %v145 = vunpack.c.l.b16 %v94
    %v146 = vunpack.c.h.b16 %v94
    %v147 = vunpack.c.l.b16 %v95
    %v148 = vunpack.c.h.b16 %v95
    %v149 = vunpack.c.l.b16 %v96
    %v150 = vunpack.c.h.b16 %v96
    %v151 = vpack.c.b16 %v121, %v119
    %v152 = vpack.c.b16 %v122, %v120
    %v153 = vpack.c.b16 %v125, %v123
    %v154 = vpack.c.b16 %v126, %v124
    %v155 = vpack.c.b16 %v129, %v127
    %v156 = vpack.c.b16 %v130, %v128
    %v157 = vpack.c.b16 %v133, %v131
    %v158 = vpack.c.b16 %v134, %v132
    %v159 = vpack.c.b16 %v137, %v135
    %v160 = vpack.c.b16 %v138, %v136
    %v161 = vpack.c.b16 %v141, %v139
    %v162 = vpack.c.b16 %v142, %v140
    %v163 = vpack.c.b16 %v145, %v143
    %v164 = vpack.c.b16 %v146, %v144
    %v165 = vpack.c.b16 %v149, %v147
    %v166 = vpack.c.b16 %v150, %v148
    %183 = vmatpush.bf16.msra.mxu0 %v165
    %184 = vmatpush.bf16.msra.mxu0 %v163
    %185 = vmatpush.bf16.msra.mxu0 %v161
    %186 = vmatpush.bf16.msra.mxu0 %v159
    %187 = vmatpush.bf16.msra.mxu0 %v157
    %188 = vmatpush.bf16.msra.mxu0 %v155
    %189 = vmatpush.bf16.msra.mxu0 %v153
    %190 = vmatpush.bf16.msra.mxu0 %v151
    %191 = vmatmul.bf16.gmra.mxu0 %v80
    %v192 = vpop.f32.mrf.mxu0
    %v193 = vadd.f32 %v99, %v192
    %v194 = vpop.f32.mrf.mxu0
    %195 = vdwg.mxu0
    %196 = vmatpush.bf16.msra.mxu0 %v166
    %197 = vmatpush.bf16.msra.mxu0 %v164
    %198 = vmatpush.bf16.msra.mxu0 %v162
    %199 = vmatpush.bf16.msra.mxu0 %v160
    %200 = vmatpush.bf16.msra.mxu0 %v158
    %201 = vmatpush.bf16.msra.mxu0 %v156
    %202 = vmatpush.bf16.msra.mxu0 %v154
    %203 = vmatpush.bf16.msra.mxu0 %v152
    %204 = vmatmul.bf16.gmra.mxu0 %v80
    %v205 = vpop.f32.mrf.mxu0
    %v206 = vadd.f32 %v100, %v205
    %v207 = vpop.f32.mrf.mxu0
    %208 = vdwg.mxu0
    %v209 = vmax.f32 %v193, 0.0
    %v210 = vpack.c.bf16 %v209, %v209
    %v211 = vld [vmem:[#allocation8] sm:$0xf]
    %v212 = vld [vmem:[#allocation8 + $0x4] sm:$0xf]
    %v213 = vld [vmem:[#allocation8 + $0x8] sm:$0xf]
    %v214 = vld [vmem:[#allocation8 + $0xc] sm:$0xf]
    %v215 = vld [vmem:[#allocation8 + $0x10] sm:$0xf]
    %v216 = vld [vmem:[#allocation8 + $0x14] sm:$0xf]
    %v217 = vld [vmem:[#allocation8 + $0x18] sm:$0xf]
    %v218 = vld [vmem:[#allocation8 + $0x1c] sm:$0xf]
    %v219 = vld [vmem:[#allocation8 + $0x20] sm:$0xf]
    %v220 = vld [vmem:[#allocation8 + $0x24] sm:$0xf]
    %v221 = vld [vmem:[#allocation8 + $0x28] sm:$0xf]
    %v222 = vld [vmem:[#allocation8 + $0x2c] sm:$0xf]
    %v223 = vld [vmem:[#allocation8 + $0x30] sm:$0xf]
    %v224 = vld [vmem:[#allocation8 + $0x34] sm:$0xf]
    %v225 = vld [vmem:[#allocation8 + $0x38] sm:$0xf]
    %v226 = vld [vmem:[#allocation8 + $0x3c] sm:$0xf]
    %v227 = vld [vmem:[%s4] sm:$0x1]
    %v229 = vperm.slane %v227, 0
    %v247 = vunpack.c.l.b16 %v211
    %v248 = vunpack.c.l.b16 %v212
    %v249 = vunpack.c.l.b16 %v213
    %v250 = vunpack.c.l.b16 %v214
    %v251 = vunpack.c.l.b16 %v215
    %v252 = vunpack.c.l.b16 %v216
    %v253 = vunpack.c.l.b16 %v217
    %v254 = vunpack.c.l.b16 %v218
    %v255 = vunpack.c.l.b16 %v219
    %v256 = vunpack.c.l.b16 %v220
    %v257 = vunpack.c.l.b16 %v221
    %v258 = vunpack.c.l.b16 %v222
    %v259 = vunpack.c.l.b16 %v223
    %v260 = vunpack.c.l.b16 %v224
    %v261 = vunpack.c.l.b16 %v225
    %v262 = vunpack.c.l.b16 %v226
    %v263 = vpack.c.b16 %v248, %v247
    %v264 = vpack.c.b16 %v250, %v249
    %v265 = vpack.c.b16 %v252, %v251
    %v266 = vpack.c.b16 %v254, %v253
    %v267 = vpack.c.b16 %v256, %v255
    %v268 = vpack.c.b16 %v258, %v257
    %v269 = vpack.c.b16 %v260, %v259
    %v270 = vpack.c.b16 %v262, %v261
    %279 = vmatpush.bf16.msra.mxu0 %v270
    %280 = vmatpush.bf16.msra.mxu0 %v269
    %281 = vmatpush.bf16.msra.mxu0 %v268
    %282 = vmatpush.bf16.msra.mxu0 %v267
    %283 = vmatpush.bf16.msra.mxu0 %v266
    %284 = vmatpush.bf16.msra.mxu0 %v265
    %285 = vmatpush.bf16.msra.mxu0 %v264
    %286 = vmatpush.bf16.msra.mxu0 %v263
    %287 = vmatmul.bf16.gmra.mxu0 %v210
    %v288 = vpop.f32.mrf.mxu0
    %v289 = vadd.f32 %v229, %v288
    %v290 = vpop.f32.mrf.mxu0
    %291 = vdwg.mxu0
    %v292 = vadd.f32 %v289, %v206
    %v293 = vmax.f32 %v292, 0.0
    %294 = vst [vmem:[#allocation10] sm:$0xff] %v293
    // Predicated region
    $region38: #{tpu_custom_call.1} parent=1 // pred_check
      _
    $region39: #{tpu_custom_call.1} parent=1 // pred_check_branch
      %296 = sbr.rel (0) target = $region41
    $region40: #{tpu_custom_call.1} parent=1 // pred_region
      %298 = vsyncadd [#allocation4], 0
      %s300 = sshll.u32 [#allocation10], 4
      %s301 = int_to_ptr.vmem [resolvable:$true] %s300
      %s302 = sshll.u32 %s5, 4
      %s303 = int_to_ptr.hbm [resolvable:$true] %s302
      %305 = dma.vmem_to_hbm [thread:$0]  %s301, 128, %s303, [#allocation4]
    $region41: #{tpu_custom_call.1} parent=1 // pred_fallthru
      _
    // Predicated region
    $region42: #{tpu_custom_call.1} parent=1 // pred_check
      _
    $region43: #{tpu_custom_call.1} parent=1 // pred_check_branch
      %307 = sbr.rel (0) target = $region45
    $region44: #{tpu_custom_call.1} parent=1 // pred_region
      %309 = dma.done [#allocation4], 128
    $region45: #{tpu_custom_call.1} parent=1 // pred_fallthru
      _
    %310 = vsyncpa [#allocation3], 1
    %311 = vsyncpa [#allocation6], 1
    %312 = vsyncpa [#allocation9], 1
    %313 = vsyncpa [#allocation4], 1

</llo_original>
